<compile_context>
chip_gen: v7x
topology: tpu7x:2x2x1
jax: 0.10.0
libtpu: 0.0.40
codegen_flags: <defaults>
</compile_context>

<pallas_src>
from functools import partial

import numpy as np
import jax
import jax.numpy as jnp
from jax.experimental import pallas as pl
from jax.experimental.pallas import tpu as pltpu


def _transition_kernel(x_ref, sb_ref, w_ref, o_ref):
    # x_ref : (TB, 2, H, W, Cin)   TB depth-pair slabs, channels-last
    # sb_ref: (2, Cin)             row 0 = folded BN scale, row 1 = folded BN bias
    # w_ref : (Cin, CoutP)         conv weight^T with the 1/8 avg-pool factor folded in
    # o_ref : (TB, H//2, W//2, CoutP)
    tb, _, h, w, cin = x_ref.shape
    h2, w2 = h // 2, w // 2
    cout_p = o_ref.shape[-1]

    x = x_ref[...]
    s = sb_ref[0:1, :]                              # (1, Cin) broadcasts over (..., W, Cin)
    b = sb_ref[1:2, :]
    y = jnp.maximum(x * s + b, 0.0)                 # BN affine + ReLU (VPU)

    # AvgPool3d(2,2) hoisted *before* the (linear) 1x1x1 conv: sum the 2x2x2 window
    # here (the 1/8 lives in w_ref) so the matmul runs on 8x fewer rows.
    y = jnp.sum(y, axis=1)                                      # depth pair -> (TB, H, W, C)
    y = jnp.sum(y.reshape(tb * h2, 2, w, cin), axis=1)          # H pair     -> (TB*H2, W, C)
    y = jnp.sum(y.reshape(tb * h2, w2, 2, cin), axis=2)         # W pair     -> (TB*H2, W2, C)

    pooled = y.reshape(tb * h2 * w2, cin).astype(w_ref.dtype)
    out = jnp.dot(pooled, w_ref[...], preferred_element_type=jnp.float32)   # MXU
    o_ref[...] = out.reshape(tb, h2, w2, cout_p).astype(o_ref.dtype)


def _largest_divisor_le(n, cap):
    cap = int(max(1, min(n, cap)))
    for t in range(cap, 0, -1):
        if n % t == 0:
            return t
    return 1


def _vmem_capacity_bytes():
    try:
        return int(pltpu.get_tpu_info().vmem_capacity_bytes)
    except Exception:
        return 64 * 1024 * 1024       # conservative fallback (= v7x physical VMEM)


@partial(jax.jit, static_argnames=("eps", "matmul_dtype", "pad_cout_to_lanes"))
def transition_forward(x_ncdhw, gamma, beta, conv_w, *, eps=1e-5,
                       matmul_dtype=jnp.float32, pad_cout_to_lanes=True):
    """BatchNorm3d (train-mode batch stats) -> ReLU -> Conv3d(k=1, no bias) -> AvgPool3d(2,2).

    x_ncdhw: (N, Cin, D, H, W) float32.  conv_w: (Cout, Cin) (1x1x1 kernel squeezed).
    Returns (N, Cout, D//2, H//2, W//2), matching the PyTorch _Transition forward.
    """
    n, cin, d, h, w = x_ncdhw.shape
    cout = conv_w.shape[0]
    d2, h2, w2 = d // 2, h // 2, w // 2
    # AvgPool3d(2,2) floors odd spatial dims -> drop the trailing element (free if even).
    x_ncdhw = x_ncdhw[:, :, : 2 * d2, : 2 * h2, : 2 * w2]

    # ---- BN batch statistics (training semantics), folded to per-channel scale/bias.
    #      Same jitted graph as the transpose below, so XLA fuses the reduction
    #      instead of burning a separate HBM pass.
    mean = jnp.mean(x_ncdhw, axis=(0, 2, 3, 4))
    var = jnp.var(x_ncdhw, axis=(0, 2, 3, 4))            # biased, like PyTorch BN
    scale = gamma * jax.lax.rsqrt(var + eps)
    bias = beta - mean * scale
    sb = jnp.stack([scale, bias]).astype(jnp.float32)    # (2, Cin), single VMEM operand

    # ---- channels-last: ONE materialized transpose; the depth-pair split is a free
    #      reshape of the contiguous NDHWC buffer (no second window transpose).
    x_ndhwc = jnp.transpose(x_ncdhw, (0, 2, 3, 4, 1))                # (N, D, H, W, C)
    bsz = n * d2
    x_view = x_ndhwc.reshape(bsz, 2, 2 * h2, 2 * w2, cin)

    # ---- 1x1x1 conv weight, transposed, with the 1/8 pool factor folded in.
    cout_p = cout
    if pad_cout_to_lanes and cout % 128 != 0:
        cout_p = ((cout + 127) // 128) * 128             # lane-dense (unmasked) output stores
    w_mat = (conv_w.T * 0.125).astype(matmul_dtype)      # (Cin, Cout)
    if cout_p != cout:
        w_mat = jnp.pad(w_mat, ((0, 0), (0, cout_p - cout)))

    # ---- tile the (batch * depth-pair) axis; size tiles from the VMEM budget so the
    #      same code is safe on v7x (64 MiB) and uses bigger tiles on v5e/v6e (128 MiB).
    vmem_cap = _vmem_capacity_bytes()
    vmem_limit = min(int(vmem_cap * 0.85), 96 * 1024 * 1024)
    tile_budget = int(vmem_limit * 0.6)                  # headroom for double-buffering etc.
    in_slab = 2 * (2 * h2) * (2 * w2) * cin * np.dtype(x_view.dtype).itemsize
    out_slab = h2 * w2 * cout_p * 4
    fixed = cin * cout_p * np.dtype(matmul_dtype).itemsize + 2 * cin * 4
    tb_cap = max(1, (tile_budget - fixed) // (2 * (in_slab + out_slab)))
    if bsz >= 2:
        tb_cap = min(tb_cap, bsz // 2)                   # grid >= 2: keep both TCs busy
    tb = _largest_divisor_le(bsz, tb_cap)
    # TODO(synk): add an H-tile grid axis (and pl.Buffered(3) on the input) for shapes
    #             whose single depth-pair slab no longer fits VMEM at tb=1.

    out_flat = pl.pallas_call(
        _transition_kernel,
        out_shape=jax.ShapeDtypeStruct((bsz, h2, w2, cout_p), jnp.float32),
        grid=(bsz // tb,),
        in_specs=[
            pl.BlockSpec((tb, 2, 2 * h2, 2 * w2, cin), lambda i: (i, 0, 0, 0, 0)),
            pl.BlockSpec((2, cin), lambda i: (0, 0)),
            pl.BlockSpec((cin, cout_p), lambda i: (0, 0)),
        ],
        out_specs=pl.BlockSpec((tb, h2, w2, cout_p), lambda i: (i, 0, 0, 0)),
        compiler_params=pltpu.CompilerParams(
            dimension_semantics=("parallel",),
            vmem_limit_bytes=vmem_limit,
        ),
    )(x_view, sb, w_mat)

    if cout_p != cout:
        out_flat = out_flat[..., :cout]
    out = out_flat.reshape(n, d2, h2, w2, cout)
    return jnp.transpose(out, (0, 4, 1, 2, 3))           # back to PyTorch NCDHW


def transition_reference(x, gamma, beta, conv_w, eps=1e-5):
    """Pure-JAX reference with the literal op order of the PyTorch module."""
    mean = jnp.mean(x, axis=(0, 2, 3, 4), keepdims=True)
    var = jnp.var(x, axis=(0, 2, 3, 4), keepdims=True)
    g = gamma.reshape(1, -1, 1, 1, 1)
    b = beta.reshape(1, -1, 1, 1, 1)
    z = (x - mean) * jax.lax.rsqrt(var + eps) * g + b
    z = jnp.maximum(z, 0.0)
    y = jnp.einsum('ncdhw,oc->nodhw', z, conv_w)          # 1x1x1 conv, no bias
    n, co, d, h, w = y.shape
    y = y.reshape(n, co, d // 2, 2, h // 2, 2, w // 2, 2)
    return y.mean(axis=(3, 5, 7))


if __name__ == "__main__":
    key = jax.random.PRNGKey(0)
    k_x, k_g, k_b, k_w = jax.random.split(key, 4)

    N, C_IN, C_OUT, D, H, W = 2, 8, 4, 4, 8, 8
    x = jax.random.normal(k_x, (N, C_IN, D, H, W), dtype=jnp.float32)

    # Deterministic parameter init (shapes from nn.BatchNorm3d / nn.Conv3d(k=1, bias=False))
    gamma = 1.0 + 0.1 * jax.random.normal(k_g, (C_IN,), dtype=jnp.float32)
    beta = 0.1 * jax.random.normal(k_b, (C_IN,), dtype=jnp.float32)
    conv_w = 0.2 * jax.random.normal(k_w, (C_OUT, C_IN), dtype=jnp.float32)  # (O,I,1,1,1) squeezed

    ref = transition_reference(x, gamma, beta, conv_w)

    # f32 path (exact-semantics check).
    out = jax.block_until_ready(transition_forward(x, gamma, beta, conv_w))
    assert out.shape == (N, C_OUT, D // 2, H // 2, W // 2), out.shape
    assert jnp.allclose(out, ref, rtol=1e-5, atol=1e-5), float(jnp.max(jnp.abs(out - ref)))

    # bf16-matmul fast path (MXU-native operands, f32 accumulation) — looser tolerance.
    out_bf16 = jax.block_until_ready(
        transition_forward(x, gamma, beta, conv_w, matmul_dtype=jnp.bfloat16))
    assert jnp.allclose(out_bf16, ref, rtol=5e-2, atol=5e-2), \
        float(jnp.max(jnp.abs(out_bf16 - ref)))

    print("KERNEL_OK")
</pallas_src>

<mosaic_0001>
module attributes {stable_mosaic.version = 11 : i64} {
  func.func @_transition_kernel(%arg0: i32, %arg1: memref<2x2x8x8x8xf32, #tpu.memory_space<vmem>>, %arg2: memref<2x8xf32, #tpu.memory_space<vmem>>, %arg3: memref<8x128xf32, #tpu.memory_space<vmem>>, %arg4: memref<2x4x4x128xf32, #tpu.memory_space<vmem>>) attributes {dimension_semantics = [#tpu.dimension_semantics<parallel>], iteration_bounds = array<i64: 2>, scalar_prefetch = 0 : i64, scratch_operands = 0 : i64, tpu.core_type = #tpu.core_type<tc>, window_params = [{transform_indices = @transform_0, window_bounds = array<i64: 2, 2, 8, 8, 8>}, {pipeline_mode = #tpu.pipeline_mode<synchronous>, transform_indices = @transform_1, window_bounds = array<i64: 2, 8>}, {pipeline_mode = #tpu.pipeline_mode<synchronous>, transform_indices = @transform_2, window_bounds = array<i64: 8, 128>}, {transform_indices = @transform_3, window_bounds = array<i64: 2, 4, 4, 128>}]} {
    %c0 = arith.constant 0 : index
    %c0_0 = arith.constant 0 : index
    %c0_1 = arith.constant 0 : index
    %c0_2 = arith.constant 0 : index
    %c0_3 = arith.constant 0 : index
    %0 = vector.load %arg1[%c0, %c0_0, %c0_1, %c0_2, %c0_3] : memref<2x2x8x8x8xf32, #tpu.memory_space<vmem>>, vector<2x2x8x8x8xf32>
    %c0_4 = arith.constant 0 : index
    %c0_5 = arith.constant 0 : index
    %1 = vector.load %arg2[%c0_4, %c0_5] : memref<2x8xf32, #tpu.memory_space<vmem>>, vector<1x8xf32>
    %c1 = arith.constant 1 : index
    %c0_6 = arith.constant 0 : index
    %2 = vector.load %arg2[%c1, %c0_6] : memref<2x8xf32, #tpu.memory_space<vmem>>, vector<1x8xf32>
    %3 = vector.shape_cast %1 : vector<1x8xf32> to vector<1x1x1x1x8xf32>
    %4 = vector.broadcast %3 : vector<1x1x1x1x8xf32> to vector<2x2x8x8x8xf32>
    %5 = arith.mulf %0, %4 : vector<2x2x8x8x8xf32>
    %6 = vector.shape_cast %2 : vector<1x8xf32> to vector<1x1x1x1x8xf32>
    %7 = vector.broadcast %6 : vector<1x1x1x1x8xf32> to vector<2x2x8x8x8xf32>
    %8 = arith.addf %5, %7 : vector<2x2x8x8x8xf32>
    %cst = arith.constant 0.000000e+00 : f32
    %9 = vector.broadcast %cst : f32 to vector<2x2x8x8x8xf32>
    %10 = arith.maximumf %8, %9 : vector<2x2x8x8x8xf32>
    %cst_7 = arith.constant dense<0.000000e+00> : vector<2x8x8x8xf32>
    %11 = vector.multi_reduction <add>, %10, %cst_7 [1] : vector<2x2x8x8x8xf32> to vector<2x8x8x8xf32>
    %12 = vector.shape_cast %11 : vector<2x8x8x8xf32> to vector<8x2x8x8xf32>
    %cst_8 = arith.constant dense<0.000000e+00> : vector<8x8x8xf32>
    %13 = vector.multi_reduction <add>, %12, %cst_8 [1] : vector<8x2x8x8xf32> to vector<8x8x8xf32>
    %14 = vector.shape_cast %13 : vector<8x8x8xf32> to vector<8x4x2x8xf32>
    %cst_9 = arith.constant dense<0.000000e+00> : vector<8x4x8xf32>
    %15 = vector.multi_reduction <add>, %14, %cst_9 [2] : vector<8x4x2x8xf32> to vector<8x4x8xf32>
    %16 = vector.shape_cast %15 : vector<8x4x8xf32> to vector<32x8xf32>
    %c0_10 = arith.constant 0 : index
    %c0_11 = arith.constant 0 : index
    %17 = vector.load %arg3[%c0_10, %c0_11] : memref<8x128xf32, #tpu.memory_space<vmem>>, vector<8x128xf32>
    %cst_12 = arith.constant dense<0.000000e+00> : vector<32x128xf32>
    %18 = tpu.matmul %16, %17, %cst_12 {dimension_numbers = #tpu.dot_dimension_numbers<[1], [0], [0], [1], [0, 0, 1, 1], [], []>} : vector<32x8xf32>, vector<8x128xf32>, vector<32x128xf32> -> vector<32x128xf32>
    %19 = vector.shape_cast %18 : vector<32x128xf32> to vector<2x4x4x128xf32>
    %c0_13 = arith.constant 0 : index
    %c0_14 = arith.constant 0 : index
    %c0_15 = arith.constant 0 : index
    %c0_16 = arith.constant 0 : index
    %20 = vector.load %arg4[%c0_13, %c0_14, %c0_15, %c0_16] : memref<2x4x4x128xf32, #tpu.memory_space<vmem>>, vector<2x4x4x128xf32>
    tpu.vector_store %arg4[%c0_13, %c0_14, %c0_15, %c0_16], %19 {strides = array<i32>} : memref<2x4x4x128xf32, #tpu.memory_space<vmem>>, vector<2x4x4x128xf32>,
    return
  }
  func.func @transform_0(%arg0: i32) -> (i32, i32, i32, i32, i32) {
    %c0_i32 = arith.constant 0 : i32
    %c0_i32_0 = arith.constant 0 : i32
    %c0_i32_1 = arith.constant 0 : i32
    %c0_i32_2 = arith.constant 0 : i32
    %c0_i32_3 = arith.constant 0 : i32
    return %arg0, %c0_i32, %c0_i32_0, %c0_i32_1, %c0_i32_2 : i32, i32, i32, i32, i32
  }
  func.func @transform_1(%arg0: i32) -> (i32, i32) {
    %c0_i32 = arith.constant 0 : i32
    %c0_i32_0 = arith.constant 0 : i32
    %c0_i32_1 = arith.constant 0 : i32
    return %c0_i32, %c0_i32_0 : i32, i32
  }
  func.func @transform_2(%arg0: i32) -> (i32, i32) {
    %c0_i32 = arith.constant 0 : i32
    %c0_i32_0 = arith.constant 0 : i32
    %c0_i32_1 = arith.constant 0 : i32
    return %c0_i32, %c0_i32_0 : i32, i32
  }
  func.func @transform_3(%arg0: i32) -> (i32, i32, i32, i32) {
    %c0_i32 = arith.constant 0 : i32
    %c0_i32_0 = arith.constant 0 : i32
    %c0_i32_1 = arith.constant 0 : i32
    %c0_i32_2 = arith.constant 0 : i32
    return %arg0, %c0_i32, %c0_i32_0, %c0_i32_1 : i32, i32, i32, i32
  }
}

</mosaic_0001>

<llo_original>
// kernel: transition_forward.1
$region0: #{transition_forward.1}
  #allocation0 [shape = 'u32[]', space=smem, size = 0x4, offset = 0x4, fixed_abs, tag = 'smem constant byte address 0x4 - core index']
  #allocation1 [shape = 'u32[144,128]{1,0:T(1,128)}', space=vmem, size = 0x12000, scoped, tag = 'internal scratch']
  %s0 = inlined_call_operand.vmem [shape: f32[4,2,8,8,8], index: 0, kind: input, shape index: {}]
  %s1 = inlined_call_operand.vmem [shape: f32[2,8], index: 1, kind: input, shape index: {}]
  %s2 = inlined_call_operand.vmem [shape: f32[8,128], index: 2, kind: input, shape index: {}]
  %s3 = inlined_call_operand.vmem [shape: f32[4,4,4,128], index: 3, kind: output, shape index: {}]
  %s4 = sld [smem:[#allocation0]]
  $region45: #{transition_forward.1} parent=0
    _
  %s6 = ssub.s32 1, %s4
  %s7 = scalar_select 0, %s6, %s4
  loop: start=0, step=1, limit=4
  $region2: #{transition_forward.1} parent=0 // loop_pre_header
    _
  $region3: #{transition_forward.1} parent=0 // loop_header
    %s9 = sphi 0, %s13
    %p10 = scmp.ge.s32.totalorder %s9, 4
    %s19 = sphi 0, %s21
    %s22 = sphi 0, %s19
    %s23 = sphi 0, %s22
    %s39 = sphi 0, %s23
    %s43 = sphi 0, %s43
    %s45 = sphi 0, %s43
    %s46 = sphi 0, %s45
    %s60 = sphi 0, %s46
    %s64 = sphi 0, %s64
    %s66 = sphi 0, %s64
    %s67 = sphi 0, %s66
    %s81 = sphi 0, %s67
    %s87 = sphi 0, %s89
    %s90 = sphi 0, %s87
    %s91 = sphi 0, %s90
    %s107 = sphi 0, %s91
  $region4: #{transition_forward.1} parent=0 // loop_header_branch
    %12 = sbr.rel (%p10) target = $region8
  $region5: #{transition_forward.1} parent=0 // loop_body
    %s14 = ssub.s32 %s9, 1
    %s15 = ssub.s32 %s9, 2
    %s16 = sadd.s32 %s9, 1
    %s17 = ssub.s32 %s9, %s16
    %p18 = scmp.eq.s32.totalorder %s17, 0
    %s20 = sadd.s32 %s19, 1
    %s21 = scalar_select %p18, %s19, %s20
    %p24 = pneg %p18
    %p25 = scmp.eq.s32.totalorder %s9, 1
    %p26 = por %p24, %p25
    %p27 = scmp.ne.s32.totalorder %s19, %s22
    %p28 = scmp.eq.s32.totalorder %s9, 0
    %p29 = por %p27, %p28
    %p30 = scmp.ne.s32.totalorder %s19, %s22
    %p31 = scmp.eq.s32.totalorder %s14, 1
    %p32 = por %p30, %p31
    %p33 = scmp.ne.s32.totalorder %s22, %s23
    %p34 = scmp.eq.s32.totalorder %s14, 0
    %p35 = por %p33, %p34
    %p36 = scmp.ne.s32.totalorder %s22, %s23
    %p37 = scmp.eq.s32.totalorder %s15, 1
    %p38 = por %p36, %p37
    %p40 = scmp.ne.s32.totalorder %s23, %s39
    %p41 = scmp.eq.s32.totalorder %s15, 0
    %p42 = por %p40, %p41
    %s44 = sadd.s32 %s43, 1
    %p47 = scmp.eq.s32.totalorder %s9, 1
    %p48 = scmp.ne.s32.totalorder %s43, %s45
    %p49 = scmp.eq.s32.totalorder %s9, 0
    %p50 = por %p48, %p49
    %p51 = scmp.ne.s32.totalorder %s43, %s45
    %p52 = scmp.eq.s32.totalorder %s14, 1
    %p53 = por %p51, %p52
    %p54 = scmp.ne.s32.totalorder %s45, %s46
    %p55 = scmp.eq.s32.totalorder %s14, 0
    %p56 = por %p54, %p55
    %p57 = scmp.ne.s32.totalorder %s45, %s46
    %p58 = scmp.eq.s32.totalorder %s15, 1
    %p59 = por %p57, %p58
    %p61 = scmp.ne.s32.totalorder %s46, %s60
    %p62 = scmp.eq.s32.totalorder %s15, 0
    %p63 = por %p61, %p62
    %s65 = sadd.s32 %s64, 1
    %p68 = scmp.eq.s32.totalorder %s9, 1
    %p69 = scmp.ne.s32.totalorder %s64, %s66
    %p70 = scmp.eq.s32.totalorder %s9, 0
    %p71 = por %p69, %p70
    %p72 = scmp.ne.s32.totalorder %s64, %s66
    %p73 = scmp.eq.s32.totalorder %s14, 1
    %p74 = por %p72, %p73
    %p75 = scmp.ne.s32.totalorder %s66, %s67
    %p76 = scmp.eq.s32.totalorder %s14, 0
    %p77 = por %p75, %p76
    %p78 = scmp.ne.s32.totalorder %s66, %s67
    %p79 = scmp.eq.s32.totalorder %s15, 1
    %p80 = por %p78, %p79
    %p82 = scmp.ne.s32.totalorder %s67, %s81
    %p83 = scmp.eq.s32.totalorder %s15, 0
    %p84 = por %p82, %p83
    %s85 = ssub.s32 %s9, %s16
    %p86 = scmp.eq.s32.totalorder %s85, 0
    %s88 = sadd.s32 %s87, 1
    %s89 = scalar_select %p86, %s87, %s88
    %p92 = pneg %p86
    %p93 = scmp.eq.s32.totalorder %s9, 1
    %p94 = por %p92, %p93
    %p95 = scmp.ne.s32.totalorder %s87, %s90
    %p96 = scmp.eq.s32.totalorder %s9, 0
    %p97 = por %p95, %p96
    %p98 = scmp.ne.s32.totalorder %s87, %s90
    %p99 = scmp.eq.s32.totalorder %s14, 1
    %p100 = por %p98, %p99
    %p101 = scmp.ne.s32.totalorder %s90, %s91
    %p102 = scmp.eq.s32.totalorder %s14, 0
    %p103 = por %p101, %p102
    %p104 = scmp.ne.s32.totalorder %s90, %s91
    %p105 = scmp.eq.s32.totalorder %s15, 1
    %p106 = por %p104, %p105
    %p108 = scmp.ne.s32.totalorder %s91, %s107
    %p109 = scmp.eq.s32.totalorder %s15, 0
    %p110 = por %p108, %p109
    %p111 = scmp.le.s32.totalorder 1, %s9
    %p112 = scmp.lt.s32.totalorder %s9, 3
    %p113 = pnand %p111, %p112
    %p114 = pneg %p113
    // Predicated region
    $region9: #{transition_forward.1} parent=5 // pred_check
      _
    $region10: #{transition_forward.1} parent=5 // pred_check_branch
      %116 = sbr.rel (%p113) target = $region12
    $region11: #{transition_forward.1} parent=5 // pred_region
      %s117 = ssub.s32 %s9, 1
      // Predicated region
      $region13: #{transition_forward.1} parent=11 // pred_check
        %p118 = pneg %p56
      $region14: #{transition_forward.1} parent=11 // pred_check_branch
        %120 = sbr.rel (%p118) target = $region16
      $region15: #{transition_forward.1} parent=11 // pred_region
        _
      $region16: #{transition_forward.1} parent=11 // pred_fallthru
        _
      // Predicated region
      $region17: #{transition_forward.1} parent=11 // pred_check
        %p121 = pneg %p77
      $region18: #{transition_forward.1} parent=11 // pred_check_branch
        %123 = sbr.rel (%p121) target = $region20
      $region19: #{transition_forward.1} parent=11 // pred_region
        _
      $region20: #{transition_forward.1} parent=11 // pred_fallthru
        _
    $region12: #{transition_forward.1} parent=5 // pred_fallthru
      _
    %p124 = scmp.lt.s32.totalorder %s9, 2
    // Predicated region
    $region21: #{transition_forward.1} parent=5 // pred_check
      %p125 = pneg %p124
    $region22: #{transition_forward.1} parent=5 // pred_check_branch
      %127 = sbr.rel (%p125) target = $region24
    $region23: #{transition_forward.1} parent=5 // pred_region
      // Predicated region
      $region25: #{transition_forward.1} parent=23 // pred_check
        %p128 = pneg %p29
      $region26: #{transition_forward.1} parent=23 // pred_check_branch
        %130 = sbr.rel (%p128) target = $region28
      $region27: #{transition_forward.1} parent=23 // pred_region
        %s131 = smul.u32 2, %s9
        %p132 = scmp.lt.s32.totalorder %s131, 3
        %s133 = scalar_select %p132, %s131, 3
        %s134 = smul.addr %s133, 16
        %s135 = smul.addr %s134, 8
        %s136 = scalar_lea.vmem %s0, %s135
        %s137 = smul.u32 2, %s9
      $region28: #{transition_forward.1} parent=23 // pred_fallthru
        _
    $region24: #{transition_forward.1} parent=5 // pred_fallthru
      _
    %p138 = scmp.le.s32.totalorder 1, %s9
    %p139 = scmp.lt.s32.totalorder %s9, 3
    %p140 = pnand %p138, %p139
    %p141 = pneg %p140
    // Predicated region
    $region29: #{transition_forward.1} parent=5 // pred_check
      _
    $region30: #{transition_forward.1} parent=5 // pred_check_branch
      %143 = sbr.rel (%p140) target = $region32
    $region31: #{transition_forward.1} parent=5 // pred_region
      %s144 = ssub.s32 %s9, 1
      %s145 = smul.u32 2, %s14
      %p146 = scmp.lt.s32.totalorder %s145, 3
      %s147 = scalar_select %p146, %s145, 3
      %s148 = smul.addr %s147, 16
      %s149 = smul.addr %s148, 8
      %s150 = scalar_lea.vmem %s0, %s149
      %p151 = pneg %p35
      %p152 = pneg %p32
      %p153 = pneg %p56
      %p154 = pneg %p53
      %p155 = pneg %p77
      %p156 = pneg %p74
      %p157 = pneg %p103
      %p158 = pneg %p100
      %s159 = smul.u32 2, %s14
      %p160 = scmp.lt.s32.totalorder %s159, 3
      %s161 = scalar_select %p160, %s159, 3
      %s162 = smul.addr %s161, 4
      %s163 = smul.addr %s162, 4
      %s164 = scalar_lea.vmem %s3, %s163
      %s165 = smul.u32 2, %s14
      %p166 = scmp.lt.s32.totalorder %s165, 3
      %s167 = scalar_select %p166, %s165, 3
      %s168 = smul.addr %s167, 16
      %s169 = smul.addr %s168, 8
      %s170 = scalar_lea.vmem %s0, %s169
      %s171 = smul.u32 2, %s14
      %s172 = smul.u32 2, %s14
      %p173 = scmp.lt.s32.totalorder %s172, 3
      %s174 = scalar_select %p173, %s172, 3
      %s175 = smul.addr %s174, 4
      %s176 = smul.addr %s175, 4
      %s177 = scalar_lea.vmem %s3, %s176
      %s178 = smul.u32 2, %s14
      %v179 = vld [vmem:[%s170] sm:$0xff]
      %v180 = vld [vmem:[%s170 + $0x8] sm:$0xff]
      %v181 = vld [vmem:[%s170 + $0x10] sm:$0xff]
      %v182 = vld [vmem:[%s170 + $0x18] sm:$0xff]
      %v183 = vld [vmem:[%s170 + $0x20] sm:$0xff]
      %v184 = vld [vmem:[%s170 + $0x28] sm:$0xff]
      %v185 = vld [vmem:[%s170 + $0x30] sm:$0xff]
      %v186 = vld [vmem:[%s170 + $0x38] sm:$0xff]
      %v187 = vld [vmem:[%s170 + $0x40] sm:$0xff]
      %v188 = vld [vmem:[%s170 + $0x48] sm:$0xff]
      %v189 = vld [vmem:[%s170 + $0x50] sm:$0xff]
      %v190 = vld [vmem:[%s170 + $0x58] sm:$0xff]
      %v191 = vld [vmem:[%s170 + $0x60] sm:$0xff]
      %v192 = vld [vmem:[%s170 + $0x68] sm:$0xff]
      %v193 = vld [vmem:[%s170 + $0x70] sm:$0xff]
      %v194 = vld [vmem:[%s170 + $0x78] sm:$0xff]
      %v195 = vld [vmem:[%s170 + $0x80] sm:$0xff]
      %v196 = vld [vmem:[%s170 + $0x88] sm:$0xff]
      %v197 = vld [vmem:[%s170 + $0x90] sm:$0xff]
      %v198 = vld [vmem:[%s170 + $0x98] sm:$0xff]
      %v199 = vld [vmem:[%s170 + $0xa0] sm:$0xff]
      %v200 = vld [vmem:[%s170 + $0xa8] sm:$0xff]
      %v201 = vld [vmem:[%s170 + $0xb0] sm:$0xff]
      %v202 = vld [vmem:[%s170 + $0xb8] sm:$0xff]
      %v203 = vld [vmem:[%s170 + $0xc0] sm:$0xff]
      %v204 = vld [vmem:[%s170 + $0xc8] sm:$0xff]
      %v205 = vld [vmem:[%s170 + $0xd0] sm:$0xff]
      %v206 = vld [vmem:[%s170 + $0xd8] sm:$0xff]
      %v207 = vld [vmem:[%s170 + $0xe0] sm:$0xff]
      %v208 = vld [vmem:[%s170 + $0xe8] sm:$0xff]
      %v209 = vld [vmem:[%s170 + $0xf0] sm:$0xff]
      %v210 = vld [vmem:[%s170 + $0xf8] sm:$0xff]
      %v211 = vld [vmem:[%s1] sm:$0x1]
      %v212 = vld [vmem:[%s1 + $0x1] sm:$0x1]
      %v213 = vlaneseq
      %v214 = vshrl.u32 %v213, 7
      %v215 = vsub.s32 0, %v214
      %v216 = vrot.slane %v211, %v215
      %v217 = vmul.f32 %v179, %v216
      %v218 = vmul.f32 %v180, %v216
      %v219 = vmul.f32 %v181, %v216
      %v220 = vmul.f32 %v182, %v216
      %v221 = vmul.f32 %v183, %v216
      %v222 = vmul.f32 %v184, %v216
      %v223 = vmul.f32 %v185, %v216
      %v224 = vmul.f32 %v186, %v216
      %v225 = vmul.f32 %v187, %v216
      %v226 = vmul.f32 %v188, %v216
      %v227 = vmul.f32 %v189, %v216
      %v228 = vmul.f32 %v190, %v216
      %v229 = vmul.f32 %v191, %v216
      %v230 = vmul.f32 %v192, %v216
      %v231 = vmul.f32 %v193, %v216
      %v232 = vmul.f32 %v194, %v216
      %v233 = vmul.f32 %v195, %v216
      %v234 = vmul.f32 %v196, %v216
      %v235 = vmul.f32 %v197, %v216
      %v236 = vmul.f32 %v198, %v216
      %v237 = vmul.f32 %v199, %v216
      %v238 = vmul.f32 %v200, %v216
      %v239 = vmul.f32 %v201, %v216
      %v240 = vmul.f32 %v202, %v216
      %v241 = vmul.f32 %v203, %v216
      %v242 = vmul.f32 %v204, %v216
      %v243 = vmul.f32 %v205, %v216
      %v244 = vmul.f32 %v206, %v216
      %v245 = vmul.f32 %v207, %v216
      %v246 = vmul.f32 %v208, %v216
      %v247 = vmul.f32 %v209, %v216
      %v248 = vmul.f32 %v210, %v216
      %v249 = vlaneseq
      %v250 = vshrl.u32 %v249, 7
      %v251 = vsub.s32 0, %v250
      %v252 = vrot.slane %v212, %v251
      %v253 = vadd.f32 %v217, %v252
      %v254 = vadd.f32 %v218, %v252
      %v255 = vadd.f32 %v219, %v252
      %v256 = vadd.f32 %v220, %v252
      %v257 = vadd.f32 %v221, %v252
      %v258 = vadd.f32 %v222, %v252
      %v259 = vadd.f32 %v223, %v252
      %v260 = vadd.f32 %v224, %v252
      %v261 = vadd.f32 %v225, %v252
      %v262 = vadd.f32 %v226, %v252
      %v263 = vadd.f32 %v227, %v252
      %v264 = vadd.f32 %v228, %v252
      %v265 = vadd.f32 %v229, %v252
      %v266 = vadd.f32 %v230, %v252
      %v267 = vadd.f32 %v231, %v252
      %v268 = vadd.f32 %v232, %v252
      %v269 = vadd.f32 %v233, %v252
      %v270 = vadd.f32 %v234, %v252
      %v271 = vadd.f32 %v235, %v252
      %v272 = vadd.f32 %v236, %v252
      %v273 = vadd.f32 %v237, %v252
      %v274 = vadd.f32 %v238, %v252
      %v275 = vadd.f32 %v239, %v252
      %v276 = vadd.f32 %v240, %v252
      %v277 = vadd.f32 %v241, %v252
      %v278 = vadd.f32 %v242, %v252
      %v279 = vadd.f32 %v243, %v252
      %v280 = vadd.f32 %v244, %v252
      %v281 = vadd.f32 %v245, %v252
      %v282 = vadd.f32 %v246, %v252
      %v283 = vadd.f32 %v247, %v252
      %v284 = vadd.f32 %v248, %v252
      %v285 = vmax.f32 %v253, 0.0
      %v286 = vmax.f32 %v254, 0.0
      %v287 = vmax.f32 %v255, 0.0
      %v288 = vmax.f32 %v256, 0.0
      %v289 = vmax.f32 %v257, 0.0
      %v290 = vmax.f32 %v258, 0.0
      %v291 = vmax.f32 %v259, 0.0
      %v292 = vmax.f32 %v260, 0.0
      %v293 = vmax.f32 %v261, 0.0
      %v294 = vmax.f32 %v262, 0.0
      %v295 = vmax.f32 %v263, 0.0
      %v296 = vmax.f32 %v264, 0.0
      %v297 = vmax.f32 %v265, 0.0
      %v298 = vmax.f32 %v266, 0.0
      %v299 = vmax.f32 %v267, 0.0
      %v300 = vmax.f32 %v268, 0.0
      %v301 = vmax.f32 %v269, 0.0
      %v302 = vmax.f32 %v270, 0.0
      %v303 = vmax.f32 %v271, 0.0
      %v304 = vmax.f32 %v272, 0.0
      %v305 = vmax.f32 %v273, 0.0
      %v306 = vmax.f32 %v274, 0.0
      %v307 = vmax.f32 %v275, 0.0
      %v308 = vmax.f32 %v276, 0.0
      %v309 = vmax.f32 %v277, 0.0
      %v310 = vmax.f32 %v278, 0.0
      %v311 = vmax.f32 %v279, 0.0
      %v312 = vmax.f32 %v280, 0.0
      %v313 = vmax.f32 %v281, 0.0
      %v314 = vmax.f32 %v282, 0.0
      %v315 = vmax.f32 %v283, 0.0
      %v316 = vmax.f32 %v284, 0.0
      %vm317 = vcmask 64512
      %v318 = vsel %vm317, %v285, 0.0
      %v319 = vsel %vm317, %v293, 0.0
      %v320 = vadd.f32 %v318, %v319
      %v321 = vsel %vm317, %v286, 0.0
      %v322 = vsel %vm317, %v294, 0.0
      %v323 = vadd.f32 %v321, %v322
      %v324 = vsel %vm317, %v287, 0.0
      %v325 = vsel %vm317, %v295, 0.0
      %v326 = vadd.f32 %v324, %v325
      %v327 = vsel %vm317, %v288, 0.0
      %v328 = vsel %vm317, %v296, 0.0
      %v329 = vadd.f32 %v327, %v328
      %v330 = vsel %vm317, %v289, 0.0
      %v331 = vsel %vm317, %v297, 0.0
      %v332 = vadd.f32 %v330, %v331
      %v333 = vsel %vm317, %v290, 0.0
      %v334 = vsel %vm317, %v298, 0.0
      %v335 = vadd.f32 %v333, %v334
      %v336 = vsel %vm317, %v291, 0.0
      %v337 = vsel %vm317, %v299, 0.0
      %v338 = vadd.f32 %v336, %v337
      %v339 = vsel %vm317, %v292, 0.0
      %v340 = vsel %vm317, %v300, 0.0
      %v341 = vadd.f32 %v339, %v340
      %v342 = vsel %vm317, %v301, 0.0
      %v343 = vsel %vm317, %v309, 0.0
      %v344 = vadd.f32 %v342, %v343
      %v345 = vsel %vm317, %v302, 0.0
      %v346 = vsel %vm317, %v310, 0.0
      %v347 = vadd.f32 %v345, %v346
      %v348 = vsel %vm317, %v303, 0.0
      %v349 = vsel %vm317, %v311, 0.0
      %v350 = vadd.f32 %v348, %v349
      %v351 = vsel %vm317, %v304, 0.0
      %v352 = vsel %vm317, %v312, 0.0
      %v353 = vadd.f32 %v351, %v352
      %v354 = vsel %vm317, %v305, 0.0
      %v355 = vsel %vm317, %v313, 0.0
      %v356 = vadd.f32 %v354, %v355
      %v357 = vsel %vm317, %v306, 0.0
      %v358 = vsel %vm317, %v314, 0.0
      %v359 = vadd.f32 %v357, %v358
      %v360 = vsel %vm317, %v307, 0.0
      %v361 = vsel %vm317, %v315, 0.0
      %v362 = vadd.f32 %v360, %v361
      %v363 = vsel %vm317, %v308, 0.0
      %v364 = vsel %vm317, %v316, 0.0
      %v365 = vadd.f32 %v363, %v364
      %v366 = vsel %vm317, %v320, 0.0
      %v367 = vsel %vm317, %v323, 0.0
      %v368 = vadd.f32 %v366, %v367
      %v369 = vsel %vm317, %v326, 0.0
      %v370 = vsel %vm317, %v329, 0.0
      %v371 = vadd.f32 %v369, %v370
      %v372 = vsel %vm317, %v332, 0.0
      %v373 = vsel %vm317, %v335, 0.0
      %v374 = vadd.f32 %v372, %v373
      %v375 = vsel %vm317, %v338, 0.0
      %v376 = vsel %vm317, %v341, 0.0
      %v377 = vadd.f32 %v375, %v376
      %v378 = vsel %vm317, %v344, 0.0
      %v379 = vsel %vm317, %v347, 0.0
      %v380 = vadd.f32 %v378, %v379
      %v381 = vsel %vm317, %v350, 0.0
      %v382 = vsel %vm317, %v353, 0.0
      %v383 = vadd.f32 %v381, %v382
      %v384 = vsel %vm317, %v356, 0.0
      %v385 = vsel %vm317, %v359, 0.0
      %v386 = vadd.f32 %v384, %v385
      %v387 = vsel %vm317, %v362, 0.0
      %v388 = vsel %vm317, %v365, 0.0
      %v389 = vadd.f32 %v387, %v388
      %v398 = vcombine.high %v368, %v368
      %v400 = vunpack.c.l.s4 1983009808
      %v401 = vunpack.c.0.s8 %v400
      %v402 = vlaneseq
      %v403 = vshrl.u32 %v402, 7
      %v404 = vsub.s32 %v401, %v403
      %v405 = vrot.slane %v368, %v404
      %v407 = vunpack.c.l.s4 1983009808
      %v408 = vunpack.c.0.s8 %v407
      %v409 = vlaneseq
      %v410 = vshrl.u32 %v409, 7
      %v411 = vsub.s32 %v408, %v410
      %v412 = vrot.slane %v398, %v411
      %v413 = vcombine.high %v405, %v405
      %v414 = vcombine.high %v412, %v412
      %v415 = vcombine.high %v371, %v371
      %v417 = vunpack.c.l.s4 1983009808
      %v418 = vunpack.c.0.s8 %v417
      %v419 = vlaneseq
      %v420 = vshrl.u32 %v419, 7
      %v421 = vsub.s32 %v418, %v420
      %v422 = vrot.slane %v371, %v421
      %v424 = vunpack.c.l.s4 1983009808
      %v425 = vunpack.c.0.s8 %v424
      %v426 = vlaneseq
      %v427 = vshrl.u32 %v426, 7
      %v428 = vsub.s32 %v425, %v427
      %v429 = vrot.slane %v415, %v428
      %v430 = vcombine.high %v422, %v422
      %v431 = vcombine.high %v429, %v429
      %v432 = vcombine.high %v374, %v374
      %v434 = vunpack.c.l.s4 1983009808
      %v435 = vunpack.c.0.s8 %v434
      %v436 = vlaneseq
      %v437 = vshrl.u32 %v436, 7
      %v438 = vsub.s32 %v435, %v437
      %v439 = vrot.slane %v374, %v438
      %v441 = vunpack.c.l.s4 1983009808
      %v442 = vunpack.c.0.s8 %v441
      %v443 = vlaneseq
      %v444 = vshrl.u32 %v443, 7
      %v445 = vsub.s32 %v442, %v444
      %v446 = vrot.slane %v432, %v445
      %v447 = vcombine.high %v439, %v439
      %v448 = vcombine.high %v446, %v446
      %v449 = vcombine.high %v377, %v377
      %v451 = vunpack.c.l.s4 1983009808
      %v452 = vunpack.c.0.s8 %v451
      %v453 = vlaneseq
      %v454 = vshrl.u32 %v453, 7
      %v455 = vsub.s32 %v452, %v454
      %v456 = vrot.slane %v377, %v455
      %v458 = vunpack.c.l.s4 1983009808
      %v459 = vunpack.c.0.s8 %v458
      %v460 = vlaneseq
      %v461 = vshrl.u32 %v460, 7
      %v462 = vsub.s32 %v459, %v461
      %v463 = vrot.slane %v449, %v462
      %v464 = vcombine.high %v456, %v456
      %v465 = vcombine.high %v463, %v463
      %v466 = vcombine.high %v380, %v380
      %v468 = vunpack.c.l.s4 1983009808
      %v469 = vunpack.c.0.s8 %v468
      %v470 = vlaneseq
      %v471 = vshrl.u32 %v470, 7
      %v472 = vsub.s32 %v469, %v471
      %v473 = vrot.slane %v380, %v472
      %v475 = vunpack.c.l.s4 1983009808
      %v476 = vunpack.c.0.s8 %v475
      %v477 = vlaneseq
      %v478 = vshrl.u32 %v477, 7
      %v479 = vsub.s32 %v476, %v478
      %v480 = vrot.slane %v466, %v479
      %v481 = vcombine.high %v473, %v473
      %v482 = vcombine.high %v480, %v480
      %v483 = vcombine.high %v383, %v383
      %v485 = vunpack.c.l.s4 1983009808
      %v486 = vunpack.c.0.s8 %v485
      %v487 = vlaneseq
      %v488 = vshrl.u32 %v487, 7
      %v489 = vsub.s32 %v486, %v488
      %v490 = vrot.slane %v383, %v489
      %v492 = vunpack.c.l.s4 1983009808
      %v493 = vunpack.c.0.s8 %v492
      %v494 = vlaneseq
      %v495 = vshrl.u32 %v494, 7
      %v496 = vsub.s32 %v493, %v495
      %v497 = vrot.slane %v483, %v496
      %v498 = vcombine.high %v490, %v490
      %v499 = vcombine.high %v497, %v497
      %v500 = vcombine.high %v386, %v386
      %v502 = vunpack.c.l.s4 1983009808
      %v503 = vunpack.c.0.s8 %v502
      %v504 = vlaneseq
      %v505 = vshrl.u32 %v504, 7
      %v506 = vsub.s32 %v503, %v505
      %v507 = vrot.slane %v386, %v506
      %v509 = vunpack.c.l.s4 1983009808
      %v510 = vunpack.c.0.s8 %v509
      %v511 = vlaneseq
      %v512 = vshrl.u32 %v511, 7
      %v513 = vsub.s32 %v510, %v512
      %v514 = vrot.slane %v500, %v513
      %v515 = vcombine.high %v507, %v507
      %v516 = vcombine.high %v514, %v514
      %v517 = vcombine.high %v389, %v389
      %v519 = vunpack.c.l.s4 1983009808
      %v520 = vunpack.c.0.s8 %v519
      %v521 = vlaneseq
      %v522 = vshrl.u32 %v521, 7
      %v523 = vsub.s32 %v520, %v522
      %v524 = vrot.slane %v389, %v523
      %v526 = vunpack.c.l.s4 1983009808
      %v527 = vunpack.c.0.s8 %v526
      %v528 = vlaneseq
      %v529 = vshrl.u32 %v528, 7
      %v530 = vsub.s32 %v527, %v529
      %v531 = vrot.slane %v517, %v530
      %v532 = vcombine.high %v524, %v524
      %v533 = vcombine.high %v531, %v531
      %vm566 = vcmask 58368
      %v567 = vsel %vm566, %v405, 0.0
      %v568 = vrot.slane %v567, 4
      %v569 = vadd.f32 %v567, %v568
      %v570 = vrot.slane %v569, 2
      %v571 = vadd.f32 %v569, %v570
      %v572 = vrot.slane %v571, 1
      %v573 = vadd.f32 %v571, %v572
      %v574 = vsel %vm566, %v413, 0.0
      %v575 = vrot.slane %v574, 4
      %v576 = vadd.f32 %v574, %v575
      %v577 = vrot.slane %v576, 2
      %v578 = vadd.f32 %v576, %v577
      %v579 = vrot.slane %v578, 1
      %v580 = vadd.f32 %v578, %v579
      %v581 = vsel %vm566, %v412, 0.0
      %v582 = vrot.slane %v581, 4
      %v583 = vadd.f32 %v581, %v582
      %v584 = vrot.slane %v583, 2
      %v585 = vadd.f32 %v583, %v584
      %v586 = vrot.slane %v585, 1
      %v587 = vadd.f32 %v585, %v586
      %v588 = vsel %vm566, %v414, 0.0
      %v589 = vrot.slane %v588, 4
      %v590 = vadd.f32 %v588, %v589
      %v591 = vrot.slane %v590, 2
      %v592 = vadd.f32 %v590, %v591
      %v593 = vrot.slane %v592, 1
      %v594 = vadd.f32 %v592, %v593
      %v595 = vsel %vm566, %v422, 0.0
      %v596 = vrot.slane %v595, 4
      %v597 = vadd.f32 %v595, %v596
      %v598 = vrot.slane %v597, 2
      %v599 = vadd.f32 %v597, %v598
      %v600 = vrot.slane %v599, 1
      %v601 = vadd.f32 %v599, %v600
      %v602 = vsel %vm566, %v430, 0.0
      %v603 = vrot.slane %v602, 4
      %v604 = vadd.f32 %v602, %v603
      %v605 = vrot.slane %v604, 2
      %v606 = vadd.f32 %v604, %v605
      %v607 = vrot.slane %v606, 1
      %v608 = vadd.f32 %v606, %v607
      %v609 = vsel %vm566, %v429, 0.0
      %v610 = vrot.slane %v609, 4
      %v611 = vadd.f32 %v609, %v610
      %v612 = vrot.slane %v611, 2
      %v613 = vadd.f32 %v611, %v612
      %v614 = vrot.slane %v613, 1
      %v615 = vadd.f32 %v613, %v614
      %v616 = vsel %vm566, %v431, 0.0
      %v617 = vrot.slane %v616, 4
      %v618 = vadd.f32 %v616, %v617
      %v619 = vrot.slane %v618, 2
      %v620 = vadd.f32 %v618, %v619
      %v621 = vrot.slane %v620, 1
      %v622 = vadd.f32 %v620, %v621
      %v623 = vsel %vm566, %v439, 0.0
      %v624 = vrot.slane %v623, 4
      %v625 = vadd.f32 %v623, %v624
      %v626 = vrot.slane %v625, 2
      %v627 = vadd.f32 %v625, %v626
      %v628 = vrot.slane %v627, 1
      %v629 = vadd.f32 %v627, %v628
      %v630 = vsel %vm566, %v447, 0.0
      %v631 = vrot.slane %v630, 4
      %v632 = vadd.f32 %v630, %v631
      %v633 = vrot.slane %v632, 2
      %v634 = vadd.f32 %v632, %v633
      %v635 = vrot.slane %v634, 1
      %v636 = vadd.f32 %v634, %v635
      %v637 = vsel %vm566, %v446, 0.0
      %v638 = vrot.slane %v637, 4
      %v639 = vadd.f32 %v637, %v638
      %v640 = vrot.slane %v639, 2
      %v641 = vadd.f32 %v639, %v640
      %v642 = vrot.slane %v641, 1
      %v643 = vadd.f32 %v641, %v642
      %v644 = vsel %vm566, %v448, 0.0
      %v645 = vrot.slane %v644, 4
      %v646 = vadd.f32 %v644, %v645
      %v647 = vrot.slane %v646, 2
      %v648 = vadd.f32 %v646, %v647
      %v649 = vrot.slane %v648, 1
      %v650 = vadd.f32 %v648, %v649
      %v651 = vsel %vm566, %v456, 0.0
      %v652 = vrot.slane %v651, 4
      %v653 = vadd.f32 %v651, %v652
      %v654 = vrot.slane %v653, 2
      %v655 = vadd.f32 %v653, %v654
      %v656 = vrot.slane %v655, 1
      %v657 = vadd.f32 %v655, %v656
      %v658 = vsel %vm566, %v464, 0.0
      %v659 = vrot.slane %v658, 4
      %v660 = vadd.f32 %v658, %v659
      %v661 = vrot.slane %v660, 2
      %v662 = vadd.f32 %v660, %v661
      %v663 = vrot.slane %v662, 1
      %v664 = vadd.f32 %v662, %v663
      %v665 = vsel %vm566, %v463, 0.0
      %v666 = vrot.slane %v665, 4
      %v667 = vadd.f32 %v665, %v666
      %v668 = vrot.slane %v667, 2
      %v669 = vadd.f32 %v667, %v668
      %v670 = vrot.slane %v669, 1
      %v671 = vadd.f32 %v669, %v670
      %v672 = vsel %vm566, %v465, 0.0
      %v673 = vrot.slane %v672, 4
      %v674 = vadd.f32 %v672, %v673
      %v675 = vrot.slane %v674, 2
      %v676 = vadd.f32 %v674, %v675
      %v677 = vrot.slane %v676, 1
      %v678 = vadd.f32 %v676, %v677
      %v679 = vsel %vm566, %v473, 0.0
      %v680 = vrot.slane %v679, 4
      %v681 = vadd.f32 %v679, %v680
      %v682 = vrot.slane %v681, 2
      %v683 = vadd.f32 %v681, %v682
      %v684 = vrot.slane %v683, 1
      %v685 = vadd.f32 %v683, %v684
      %v686 = vsel %vm566, %v481, 0.0
      %v687 = vrot.slane %v686, 4
      %v688 = vadd.f32 %v686, %v687
      %v689 = vrot.slane %v688, 2
      %v690 = vadd.f32 %v688, %v689
      %v691 = vrot.slane %v690, 1
      %v692 = vadd.f32 %v690, %v691
      %v693 = vsel %vm566, %v480, 0.0
      %v694 = vrot.slane %v693, 4
      %v695 = vadd.f32 %v693, %v694
      %v696 = vrot.slane %v695, 2
      %v697 = vadd.f32 %v695, %v696
      %v698 = vrot.slane %v697, 1
      %v699 = vadd.f32 %v697, %v698
      %v700 = vsel %vm566, %v482, 0.0
      %v701 = vrot.slane %v700, 4
      %v702 = vadd.f32 %v700, %v701
      %v703 = vrot.slane %v702, 2
      %v704 = vadd.f32 %v702, %v703
      %v705 = vrot.slane %v704, 1
      %v706 = vadd.f32 %v704, %v705
      %v707 = vsel %vm566, %v490, 0.0
      %v708 = vrot.slane %v707, 4
      %v709 = vadd.f32 %v707, %v708
      %v710 = vrot.slane %v709, 2
      %v711 = vadd.f32 %v709, %v710
      %v712 = vrot.slane %v711, 1
      %v713 = vadd.f32 %v711, %v712
      %v714 = vsel %vm566, %v498, 0.0
      %v715 = vrot.slane %v714, 4
      %v716 = vadd.f32 %v714, %v715
      %v717 = vrot.slane %v716, 2
      %v718 = vadd.f32 %v716, %v717
      %v719 = vrot.slane %v718, 1
      %v720 = vadd.f32 %v718, %v719
      %v721 = vsel %vm566, %v497, 0.0
      %v722 = vrot.slane %v721, 4
      %v723 = vadd.f32 %v721, %v722
      %v724 = vrot.slane %v723, 2
      %v725 = vadd.f32 %v723, %v724
      %v726 = vrot.slane %v725, 1
      %v727 = vadd.f32 %v725, %v726
      %v728 = vsel %vm566, %v499, 0.0
      %v729 = vrot.slane %v728, 4
      %v730 = vadd.f32 %v728, %v729
      %v731 = vrot.slane %v730, 2
      %v732 = vadd.f32 %v730, %v731
      %v733 = vrot.slane %v732, 1
      %v734 = vadd.f32 %v732, %v733
      %v735 = vsel %vm566, %v507, 0.0
      %v736 = vrot.slane %v735, 4
      %v737 = vadd.f32 %v735, %v736
      %v738 = vrot.slane %v737, 2
      %v739 = vadd.f32 %v737, %v738
      %v740 = vrot.slane %v739, 1
      %v741 = vadd.f32 %v739, %v740
      %v742 = vsel %vm566, %v515, 0.0
      %v743 = vrot.slane %v742, 4
      %v744 = vadd.f32 %v742, %v743
      %v745 = vrot.slane %v744, 2
      %v746 = vadd.f32 %v744, %v745
      %v747 = vrot.slane %v746, 1
      %v748 = vadd.f32 %v746, %v747
      %v749 = vsel %vm566, %v514, 0.0
      %v750 = vrot.slane %v749, 4
      %v751 = vadd.f32 %v749, %v750
      %v752 = vrot.slane %v751, 2
      %v753 = vadd.f32 %v751, %v752
      %v754 = vrot.slane %v753, 1
      %v755 = vadd.f32 %v753, %v754
      %v756 = vsel %vm566, %v516, 0.0
      %v757 = vrot.slane %v756, 4
      %v758 = vadd.f32 %v756, %v757
      %v759 = vrot.slane %v758, 2
      %v760 = vadd.f32 %v758, %v759
      %v761 = vrot.slane %v760, 1
      %v762 = vadd.f32 %v760, %v761
      %v763 = vsel %vm566, %v524, 0.0
      %v764 = vrot.slane %v763, 4
      %v765 = vadd.f32 %v763, %v764
      %v766 = vrot.slane %v765, 2
      %v767 = vadd.f32 %v765, %v766
      %v768 = vrot.slane %v767, 1
      %v769 = vadd.f32 %v767, %v768
      %v770 = vsel %vm566, %v532, 0.0
      %v771 = vrot.slane %v770, 4
      %v772 = vadd.f32 %v770, %v771
      %v773 = vrot.slane %v772, 2
      %v774 = vadd.f32 %v772, %v773
      %v775 = vrot.slane %v774, 1
      %v776 = vadd.f32 %v774, %v775
      %v777 = vsel %vm566, %v531, 0.0
      %v778 = vrot.slane %v777, 4
      %v779 = vadd.f32 %v777, %v778
      %v780 = vrot.slane %v779, 2
      %v781 = vadd.f32 %v779, %v780
      %v782 = vrot.slane %v781, 1
      %v783 = vadd.f32 %v781, %v782
      %v784 = vsel %vm566, %v533, 0.0
      %v785 = vrot.slane %v784, 4
      %v786 = vadd.f32 %v784, %v785
      %v787 = vrot.slane %v786, 2
      %v788 = vadd.f32 %v786, %v787
      %v789 = vrot.slane %v788, 1
      %v790 = vadd.f32 %v788, %v789
      %v791 = vld [vmem:[%s2] sm:$0xff]
      %vm824 = vcmask 1041409
      %v825 = vsel %vm824, %v580, %v573
      %vm826 = vcmask 1042434
      %v827 = vsel %vm826, %v587, %v825
      %vm828 = vcmask 1043459
      %v829 = vsel %vm828, %v594, %v827
      %vm830 = vcmask 1044484
      %v831 = vsel %vm830, %v601, %v829
      %vm832 = vcmask 1045509
      %v833 = vsel %vm832, %v608, %v831
      %vm834 = vcmask 1046534
      %v835 = vsel %vm834, %v615, %v833
      %vm836 = vcmask 1047559
      %v837 = vsel %vm836, %v622, %v835
      %v838 = vsel %vm824, %v636, %v629
      %v839 = vsel %vm826, %v643, %v838
      %v840 = vsel %vm828, %v650, %v839
      %v841 = vsel %vm830, %v657, %v840
      %v842 = vsel %vm832, %v664, %v841
      %v843 = vsel %vm834, %v671, %v842
      %v844 = vsel %vm836, %v678, %v843
      %v845 = vsel %vm824, %v692, %v685
      %v846 = vsel %vm826, %v699, %v845
      %v847 = vsel %vm828, %v706, %v846
      %v848 = vsel %vm830, %v713, %v847
      %v849 = vsel %vm832, %v720, %v848
      %v850 = vsel %vm834, %v727, %v849
      %v851 = vsel %vm836, %v734, %v850
      %v852 = vsel %vm824, %v748, %v741
      %v853 = vsel %vm826, %v755, %v852
      %v854 = vsel %vm828, %v762, %v853
      %v855 = vsel %vm830, %v769, %v854
      %v856 = vsel %vm832, %v776, %v855
      %v857 = vsel %vm834, %v783, %v856
      %v858 = vsel %vm836, %v790, %v857
      %v859 = vsel %vm317, %v837, 0
      %v861 = vsel %vm317, %v844, 0
      %v863 = vsel %vm317, %v851, 0
      %v865 = vsel %vm317, %v858, 0
      %867 = vmatprep.subr.mxu0 0.0
      %868 = vmatpush1.msra.mxu0 %v791
      %869 = vmatprep.subr.mxu0 0.0
      %870 = vmatpush1.msra.mxu0 0.0
      %871 = vmatprep.subr.mxu0 0.0
      %872 = vmatpush1.msra.mxu0 0.0
      %873 = vmatprep.subr.mxu0 0.0
      %874 = vmatpush1.msra.mxu0 0.0
      %875 = vmatprep.subr.mxu0 0.0
      %876 = vmatpush1.msra.mxu0 0.0
      %877 = vmatprep.subr.mxu0 0.0
      %878 = vmatpush1.msra.mxu0 0.0
      %879 = vmatprep.subr.mxu0 0.0
      %880 = vmatpush1.msra.mxu0 0.0
      %881 = vmatprep.subr.mxu0 0.0
      %882 = vmatpush1.msra.mxu0 0.0
      %883 = vmatprep.subr.mxu0 0.0
      %884 = vmatpush1.msra.mxu0 0.0
      %885 = vmatprep.subr.mxu0 0.0
      %886 = vmatpush1.msra.mxu0 0.0
      %887 = vmatprep.subr.mxu0 0.0
      %888 = vmatpush1.msra.mxu0 0.0
      %889 = vmatprep.subr.mxu0 0.0
      %890 = vmatpush1.msra.mxu0 0.0
      %891 = vmatprep.subr.mxu0 0.0
      %892 = vmatpush1.msra.mxu0 0.0
      %893 = vmatprep.subr.mxu0 0.0
      %894 = vmatpush1.msra.mxu0 0.0
      %895 = vmatprep.subr.mxu0 0.0
      %896 = vmatpush1.msra.mxu0 0.0
      %897 = vmatprep.subr.mxu0 0.0
      %898 = vmatpush1.msra.mxu0 0.0
      %899 = vmatprep.subr.mxu0 0.0
      %900 = vmatpush1.msra.mxu0 0.0
      %901 = vmatprep.subr.mxu0 0.0
      %902 = vmatpush1.msra.mxu0 0.0
      %903 = vmatprep.subr.mxu0 0.0
      %904 = vmatpush1.msra.mxu0 0.0
      %905 = vmatprep.subr.mxu0 0.0
      %906 = vmatpush1.msra.mxu0 0.0
      %907 = vmatprep.subr.mxu0 0.0
      %908 = vmatpush1.msra.mxu0 0.0
      %909 = vmatprep.subr.mxu0 0.0
      %910 = vmatpush1.msra.mxu0 0.0
      %911 = vmatprep.subr.mxu0 0.0
      %912 = vmatpush1.msra.mxu0 0.0
      %913 = vmatprep.subr.mxu0 0.0
      %914 = vmatpush1.msra.mxu0 0.0
      %915 = vmatprep.subr.mxu0 0.0
      %916 = vmatpush1.msra.mxu0 0.0
      %917 = vmatprep.subr.mxu0 0.0
      %918 = vmatpush1.msra.mxu0 0.0
      %919 = vmatprep.subr.mxu0 0.0
      %920 = vmatpush1.msra.mxu0 0.0
      %921 = vmatprep.subr.mxu0 0.0
      %922 = vmatpush1.msra.mxu0 0.0
      %923 = vmatprep.subr.mxu0 0.0
      %924 = vmatpush1.msra.mxu0 0.0
      %925 = vmatprep.subr.mxu0 0.0
      %926 = vmatpush1.msra.mxu0 0.0
      %927 = vmatprep.subr.mxu0 0.0
      %928 = vmatpush1.msra.mxu0 0.0
      %929 = vmatprep.subr.mxu0 0.0
      %930 = vmatpush1.msra.mxu0 0.0
      %931 = vmatprep.mubr.f32.mxu0 0.0
      %932 = vmatmul.mubr.f32.gmra.mrb[0].mxu0 %v859
      %v933 = vpop.f32.mrb[0].mxu0
      %v934 = vadd.f32 0.0, %v933
      %v935 = vpop.f32.mrb[0].mxu0
      %936 = vmatprep.mubr.f32.mxu0 0.0
      %937 = vmatmul.mubr.f32.gmra.mrb[0].mxu0 %v861
      %v938 = vpop.f32.mrb[0].mxu0
      %v939 = vadd.f32 0.0, %v938
      %v940 = vpop.f32.mrb[0].mxu0
      %941 = vmatprep.mubr.f32.mxu0 0.0
      %942 = vmatmul.mubr.f32.gmra.mrb[0].mxu0 %v863
      %v943 = vpop.f32.mrb[0].mxu0
      %v944 = vadd.f32 0.0, %v943
      %v945 = vpop.f32.mrb[0].mxu0
      %946 = vmatprep.mubr.f32.mxu0 0.0
      %947 = vmatmul.mubr.f32.gmra.mrb[0].mxu0 %v865
      %v948 = vpop.f32.mrb[0].mxu0
      %v949 = vadd.f32 0.0, %v948
      %v950 = vpop.f32.mrb[0].mxu0
      %951 = vdwg.mxu0
      %v956 = vcombine.high %v934, %v934
      %v957 = vcombine.high %v939, %v939
      %v958 = vcombine.high %v944, %v944
      %v959 = vcombine.high %v949, %v949
      %964 = vst [vmem:[%s177] sm:$0xf] %v934
      %965 = vst [vmem:[%s177 + $0x4] sm:$0xf] %v956
      %966 = vst [vmem:[%s177 + $0x8] sm:$0xf] %v939
      %967 = vst [vmem:[%s177 + $0xc] sm:$0xf] %v957
      %968 = vst [vmem:[%s177 + $0x10] sm:$0xf] %v944
      %969 = vst [vmem:[%s177 + $0x14] sm:$0xf] %v958
      %970 = vst [vmem:[%s177 + $0x18] sm:$0xf] %v949
      %971 = vst [vmem:[%s177 + $0x1c] sm:$0xf] %v959
      %s972 = smul.u32 2, %s14
      %p973 = scmp.lt.s32.totalorder %s972, 3
      %s974 = scalar_select %p973, %s972, 3
      %s975 = smul.addr %s974, 4
      %s976 = smul.addr %s975, 4
      %s977 = scalar_lea.vmem %s3, %s976
      // Predicated region
      $region33: #{transition_forward.1} parent=31 // pred_check
        %p978 = pneg %p100
      $region34: #{transition_forward.1} parent=31 // pred_check_branch
        %980 = sbr.rel (%p978) target = $region36
      $region35: #{transition_forward.1} parent=31 // pred_region
        %s981 = smul.u32 2, %s14
      $region36: #{transition_forward.1} parent=31 // pred_fallthru
        _
    $region32: #{transition_forward.1} parent=5 // pred_fallthru
      _
    %p982 = scmp.le.s32.totalorder 2, %s9
    // Predicated region
    $region37: #{transition_forward.1} parent=5 // pred_check
      %p983 = pneg %p982
    $region38: #{transition_forward.1} parent=5 // pred_check_branch
      %985 = sbr.rel (%p983) target = $region40
    $region39: #{transition_forward.1} parent=5 // pred_region
      %s986 = ssub.s32 %s9, 2
      // Predicated region
      $region41: #{transition_forward.1} parent=39 // pred_check
        %p987 = pneg %p106
      $region42: #{transition_forward.1} parent=39 // pred_check_branch
        %989 = sbr.rel (%p987) target = $region44
      $region43: #{transition_forward.1} parent=39 // pred_region
        %s990 = smul.u32 2, %s15
        %p991 = scmp.lt.s32.totalorder %s990, 3
        %s992 = scalar_select %p991, %s990, 3
        %s993 = smul.addr %s992, 4
        %s994 = smul.addr %s993, 4
        %s995 = scalar_lea.vmem %s3, %s994
      $region44: #{transition_forward.1} parent=39 // pred_fallthru
        _
    $region40: #{transition_forward.1} parent=5 // pred_fallthru
      _
  $region6: #{transition_forward.1} parent=0 // loop_footer
    %s13 = sadd.s32 1, %s9
  $region7: #{transition_forward.1} parent=0 // loop_footer_branch
    %8 = sbr.rel target = $region3
  $region8: #{transition_forward.1} parent=0 // loop_exit
    _

</llo_original>
